<compile_context>
chip_gen: v5e
topology: v5e:2x2
jax: 0.10.0
libtpu: 0.0.40
codegen_flags: <defaults>
</compile_context>

<pallas_src>
import numpy as np

import jax
import jax.numpy as jnp
from jax.experimental import pallas as pl
from jax.experimental.pallas import tpu as pltpu

_LANE = 128                   # vreg lane width
_SUBLANE = 8                  # vreg sublane height (f32)
_MAX_UNTILED_K = 512          # K <= this: single K step, block == full K dim
_VMEM_LIMIT_BYTES = 48 << 20  # > v5e/v6e default scoped caps, < v7x 64 MiB


def _round_up(x: int, m: int) -> int:
    return (x + m - 1) // m * m


def _pick_tile(padded_dim: int, candidates) -> int:
    for c in candidates:
        if padded_dim >= c and padded_dim % c == 0:
            return c
    return padded_dim


def _plan_kn(K: int, N: int):
    """Static (per-layer) padded sizes and tile sizes for the K and N axes."""
    n_pad = _round_up(N, _LANE)                 # lane-dense output tiles
    tn = _pick_tile(n_pad, (256, 128))
    if K <= _MAX_UNTILED_K:
        k_pad, tk = K, K                        # one K step; block == full dim
    else:
        k_pad = _round_up(K, _LANE)
        tk = _pick_tile(k_pad, (512, 256, 128))
    return k_pad, tk, n_pad, tn


def _linear_bias_kernel(x_ref, w_ref, b_ref, o_ref, acc_ref):
    # x_ref: (tm, tk)  w_ref: (tk, tn)  b_ref: (1, tn)  o_ref: (tm, tn)
    # acc_ref: f32 VMEM scratch (tm, tn), resident across the K grid axis.
    k = pl.program_id(2)

    @pl.when(k == 0)
    def _():
        acc_ref[...] = jnp.zeros_like(acc_ref)

    acc_ref[...] += jnp.dot(x_ref[...], w_ref[...],
                            preferred_element_type=jnp.float32)

    @pl.when(k == pl.num_programs(2) - 1)
    def _():
        o_ref[...] = (acc_ref[...] + b_ref[...]).astype(o_ref.dtype)


def _linear_padded(x, w_p, b_p, *, n_valid: int, tk: int, tn: int,
                   block_m: int = 256):
    """y = x @ w + b with pre-padded parameters.

    x: (..., K)   w_p: (k_pad, n_pad)   b_p: (1, n_pad)   ->  (..., n_valid)
    """
    *lead, K = x.shape
    k_pad, n_pad = w_p.shape
    M = int(np.prod(lead)) if lead else 1
    x2 = x.reshape(M, K)

    # M tile: multiple of 8 sublanes; force >=2 grid steps when possible so
    # both v7x TensorCores get work (M is the megacore-sharded "parallel" axis).
    tm = min(_round_up(block_m, _SUBLANE), _round_up(M, _SUBLANE))
    if M > _SUBLANE and _round_up(M, tm) // tm < 2:
        tm = _round_up((M + 1) // 2, _SUBLANE)
    m_pad = _round_up(M, tm)

    # Only the activations may need a per-call pad (params padded in __init__).
    if (m_pad, k_pad) != (M, K):
        x2 = jnp.pad(x2, ((0, m_pad - M), (0, k_pad - K)))

    grid = (m_pad // tm, n_pad // tn, k_pad // tk)

    itemsize = jnp.dtype(x.dtype).itemsize
    cost = pl.CostEstimate(
        flops=2 * m_pad * k_pad * n_pad,
        transcendentals=0,
        bytes_accessed=itemsize * (grid[1] * m_pad * k_pad     # x per N tile
                                   + grid[0] * k_pad * n_pad   # w per M tile
                                   + grid[0] * n_pad           # bias
                                   + m_pad * n_pad))           # output

    out = pl.pallas_call(
        _linear_bias_kernel,
        out_shape=jax.ShapeDtypeStruct((m_pad, n_pad), x.dtype),
        grid_spec=pltpu.PrefetchScalarGridSpec(
            num_scalar_prefetch=0,
            grid=grid,
            in_specs=[
                # activations: index constant in j (not tied to the N axis)
                pl.BlockSpec((tm, tk), lambda i, j, k: (i, k)),
                # weights: tiled over both K and N (never fully VMEM-resident)
                pl.BlockSpec((tk, tn), lambda i, j, k: (k, j)),
                # bias: one lane-dense row per N tile
                pl.BlockSpec((1, tn), lambda i, j, k: (0, j)),
            ],
            out_specs=pl.BlockSpec((tm, tn), lambda i, j, k: (i, j)),
            scratch_shapes=[pltpu.VMEM((tm, tn), jnp.float32)],
        ),
        compiler_params=pltpu.CompilerParams(
            dimension_semantics=("parallel", "parallel", "arbitrary"),
            vmem_limit_bytes=_VMEM_LIMIT_BYTES),
        cost_estimate=cost,
    )(x2, w_p, b_p)

    if (m_pad, n_pad) != (M, n_valid):
        out = out[:M, :n_valid]
    return out.reshape(*lead, n_valid)


def linear_pallas(x, w, b, *, block_m: int = 256):
    """Convenience: y = x @ w + b, padding the params per call.

    x: (..., K), w: (K, N), b: (N,)  ->  (..., N).
    Prefer FeedForwardLayerPallas for repeated calls (params padded once).
    """
    K, N = w.shape
    k_pad, tk, n_pad, tn = _plan_kn(K, N)
    w_p = jnp.pad(w, ((0, k_pad - K), (0, n_pad - N)))
    b_p = jnp.pad(b.reshape(1, N), ((0, 0), (0, n_pad - N)))
    return _linear_padded(x, w_p, b_p, n_valid=N, tk=tk, tn=tn, block_m=block_m)


class FeedForwardLayerPallas:
    """Mirrors text_classification FeedForwardLayer.forward (a single Linear)."""

    def __init__(self, input_dims: int, output_dims: int, key, *,
                 block_m: int = 256):
        self._input_dims = input_dims
        self._output_dims = output_dims
        self._block_m = block_m

        k_w, k_b = jax.random.split(key)
        bound = 1.0 / float(np.sqrt(input_dims))
        # PyTorch Linear stores weight as (out, in); keep it transposed
        # (in, out) so the kernel computes x @ w directly on the MXU.
        self.w = jax.random.uniform(
            k_w, (input_dims, output_dims),
            minval=-bound, maxval=bound, dtype=jnp.float32)
        self.b = jax.random.uniform(
            k_b, (output_dims,),
            minval=-bound, maxval=bound, dtype=jnp.float32)

        # Pad the parameters ONCE so the steady-state forward only touches
        # x, w_p, b_p, y (no per-call HBM copies of the weights).
        k_pad, self._tk, n_pad, self._tn = _plan_kn(input_dims, output_dims)
        self._w_p = jnp.pad(self.w, ((0, k_pad - input_dims),
                                     (0, n_pad - output_dims)))
        self._b_p = jnp.pad(self.b.reshape(1, output_dims),
                            ((0, 0), (0, n_pad - output_dims)))
        # TODO(synk): optionally cast x/w tiles to bf16 before jnp.dot (keeping
        # f32 accumulation + f32 bias add) for 2-4x MXU throughput on
        # v5e/v6e/v7x, at a small accuracy cost vs. the f32 PyTorch reference.

    def __call__(self, x):
        return _linear_padded(x, self._w_p, self._b_p,
                              n_valid=self._output_dims,
                              tk=self._tk, tn=self._tn,
                              block_m=self._block_m)


if __name__ == "__main__":
    key = jax.random.PRNGKey(0)
    k_x, k_p, k_x2, k_p2 = jax.random.split(key, 4)

    # Tolerance note: the reference matmul (XLA) and the in-kernel MXU matmul
    # may use different f32 multi-pass strategies on TPU, so the comparison is
    # done against a HIGHEST-precision reference with a modest tolerance.
    TOL = dict(atol=2e-2, rtol=2e-2)

    # Small shapes consistent with the module: (batch, seq, input_dims).
    B, SEQ, IN_DIMS, OUT_DIMS = 2, 8, 32, 32
    x = jax.random.normal(k_x, (B, SEQ, IN_DIMS), dtype=jnp.float32)
    layer = FeedForwardLayerPallas(IN_DIMS, OUT_DIMS, k_p)
    y = layer(x)
    jax.block_until_ready(y)
    ref = jnp.dot(x, layer.w, precision=jax.lax.Precision.HIGHEST) + layer.b
    assert y.shape == (B, SEQ, OUT_DIMS)
    assert jnp.allclose(y, ref, **TOL)

    # Exercise the K-tiled ("arbitrary" axis, multi-step accumulator) path.
    IN2, OUT2 = 640, 256
    x2 = jax.random.normal(k_x2, (B, SEQ, IN2), dtype=jnp.float32)
    layer2 = FeedForwardLayerPallas(IN2, OUT2, k_p2)
    y2 = layer2(x2)
    jax.block_until_ready(y2)
    ref2 = jnp.dot(x2, layer2.w, precision=jax.lax.Precision.HIGHEST) + layer2.b
    assert y2.shape == (B, SEQ, OUT2)
    assert jnp.allclose(y2, ref2, **TOL)

    print("KERNEL_OK")
</pallas_src>

<mosaic_0001>
module attributes {stable_mosaic.version = 11 : i64} {
  func.func @_linear_bias_kernel(%arg0: i32, %arg1: i32, %arg2: i32, %arg3: memref<8x32xf32, #tpu.memory_space<vmem>>, %arg4: memref<32x128xf32, #tpu.memory_space<vmem>>, %arg5: memref<1x128xf32, #tpu.memory_space<vmem>>, %arg6: memref<8x128xf32, #tpu.memory_space<vmem>>, %arg7: memref<8x128xf32, #tpu.memory_space<vmem>>) attributes {dimension_semantics = [#tpu.dimension_semantics<parallel>, #tpu.dimension_semantics<parallel>, #tpu.dimension_semantics<arbitrary>], iteration_bounds = array<i64: 2, 1, 1>, scalar_prefetch = 0 : i64, scratch_operands = 1 : i64, tpu.core_type = #tpu.core_type<tc>, window_params = [{transform_indices = @transform_0, window_bounds = array<i64: 8, 32>}, {transform_indices = @transform_1, window_bounds = array<i64: 32, 128>}, {transform_indices = @transform_2, window_bounds = array<i64: 1, 128>}, {transform_indices = @transform_3, window_bounds = array<i64: 8, 128>}]} {
    %c0_i32 = arith.constant 0 : i32
    %0 = arith.cmpi eq, %arg2, %c0_i32 : i32
    %1 = arith.extui %0 : i1 to i32
    %c0_i32_0 = arith.constant 0 : i32
    %2 = arith.cmpi ne, %1, %c0_i32_0 : i32
    scf.if %2 {
      %cst_10 = arith.constant 0.000000e+00 : f32
      %12 = vector.broadcast %cst_10 : f32 to vector<8x128xf32>
      %c0_11 = arith.constant 0 : index
      %c0_12 = arith.constant 0 : index
      %13 = vector.load %arg7[%c0_11, %c0_12] : memref<8x128xf32, #tpu.memory_space<vmem>>, vector<8x128xf32>
      tpu.vector_store %arg7[%c0_11, %c0_12], %12 {strides = array<i32>} : memref<8x128xf32, #tpu.memory_space<vmem>>, vector<8x128xf32>,
    } else {
    }
    %c0 = arith.constant 0 : index
    %c0_1 = arith.constant 0 : index
    %3 = vector.load %arg7[%c0, %c0_1] : memref<8x128xf32, #tpu.memory_space<vmem>>, vector<8x128xf32>
    %c0_2 = arith.constant 0 : index
    %c0_3 = arith.constant 0 : index
    %4 = vector.load %arg3[%c0_2, %c0_3] : memref<8x32xf32, #tpu.memory_space<vmem>>, vector<8x32xf32>
    %c0_4 = arith.constant 0 : index
    %c0_5 = arith.constant 0 : index
    %5 = vector.load %arg4[%c0_4, %c0_5] : memref<32x128xf32, #tpu.memory_space<vmem>>, vector<32x128xf32>
    %cst = arith.constant dense<0.000000e+00> : vector<8x128xf32>
    %6 = tpu.matmul %4, %5, %cst {dimension_numbers = #tpu.dot_dimension_numbers<[1], [0], [0], [1], [0, 0, 1, 1], [], []>} : vector<8x32xf32>, vector<32x128xf32>, vector<8x128xf32> -> vector<8x128xf32>
    %7 = arith.addf %3, %6 : vector<8x128xf32>
    %c0_6 = arith.constant 0 : index
    %c0_7 = arith.constant 0 : index
    %8 = vector.load %arg7[%c0_6, %c0_7] : memref<8x128xf32, #tpu.memory_space<vmem>>, vector<8x128xf32>
    tpu.vector_store %arg7[%c0_6, %c0_7], %7 {strides = array<i32>} : memref<8x128xf32, #tpu.memory_space<vmem>>, vector<8x128xf32>,
    %c0_i32_8 = arith.constant 0 : i32
    %9 = arith.cmpi eq, %arg2, %c0_i32_8 : i32
    %10 = arith.extui %9 : i1 to i32
    %c0_i32_9 = arith.constant 0 : i32
    %11 = arith.cmpi ne, %10, %c0_i32_9 : i32
    scf.if %11 {
      %c0_10 = arith.constant 0 : index
      %c0_11 = arith.constant 0 : index
      %12 = vector.load %arg7[%c0_10, %c0_11] : memref<8x128xf32, #tpu.memory_space<vmem>>, vector<8x128xf32>
      %c0_12 = arith.constant 0 : index
      %c0_13 = arith.constant 0 : index
      %13 = vector.load %arg5[%c0_12, %c0_13] : memref<1x128xf32, #tpu.memory_space<vmem>>, vector<1x128xf32>
      %14 = vector.broadcast %13 : vector<1x128xf32> to vector<8x128xf32>
      %15 = arith.addf %12, %14 : vector<8x128xf32>
      %c0_14 = arith.constant 0 : index
      %c0_15 = arith.constant 0 : index
      %16 = vector.load %arg6[%c0_14, %c0_15] : memref<8x128xf32, #tpu.memory_space<vmem>>, vector<8x128xf32>
      tpu.vector_store %arg6[%c0_14, %c0_15], %15 {strides = array<i32>} : memref<8x128xf32, #tpu.memory_space<vmem>>, vector<8x128xf32>,
    } else {
    }
    return
  }
  func.func @transform_0(%arg0: i32, %arg1: i32, %arg2: i32) -> (i32, i32) {
    %c0_i32 = arith.constant 0 : i32
    return %arg0, %arg2 : i32, i32
  }
  func.func @transform_1(%arg0: i32, %arg1: i32, %arg2: i32) -> (i32, i32) {
    %c0_i32 = arith.constant 0 : i32
    return %arg2, %arg1 : i32, i32
  }
  func.func @transform_2(%arg0: i32, %arg1: i32, %arg2: i32) -> (i32, i32) {
    %c0_i32 = arith.constant 0 : i32
    %c0_i32_0 = arith.constant 0 : i32
    return %c0_i32, %arg1 : i32, i32
  }
  func.func @transform_3(%arg0: i32, %arg1: i32, %arg2: i32) -> (i32, i32) {
    %c0_i32 = arith.constant 0 : i32
    return %arg0, %arg1 : i32, i32
  }
}

</mosaic_0001>

<llo_original>
// kernel: tpu_custom_call.1
$region0: #{tpu_custom_call.1}
  #allocation0 [shape = 'u32[]', space=smem, size = 0x4, offset = 0x4, fixed_abs, tag = 'smem constant byte address 0x4 - core index']
  #allocation1 [shape = 'u32[72,128]{1,0:T(1,128)}', space=vmem, size = 0x9000, scoped, tag = 'internal scratch']
  #allocation2 [shape = 'f32[8,128]{1,0:T(8,128)}', space=vmem, size = 0x1000, scoped, tag = 'scratch operand']
  %s0 = inlined_call_operand.hbm [shape: f32[16,32], index: 0, kind: input, shape index: {}]
  %s1 = inlined_call_operand.hbm [shape: f32[32,128], index: 1, kind: input, shape index: {}]
  %s2 = inlined_call_operand.vmem [shape: f32[1,128], index: 2, kind: input, shape index: {}]
  %s3 = inlined_call_operand.hbm [shape: f32[16,128], index: 3, kind: output, shape index: {}]
  %s4 = sld [smem:[#allocation0]]
  $region61: #{tpu_custom_call.1} parent=0
    _
  %s6 = ssub.s32 1, %s4
  %s7 = scalar_select 0, %s6, %s4
  $region1: #{tpu_custom_call.1} parent=0
    #allocation3 [shape = 'u8[8192]{0}', space=vmem, size = 0x2000, scoped, tag = 'input window, operand 0']
    #allocation4 [shape = 's32[2]{0}', space=sflag, size = 0x8, scoped, tag = 'scoped memory for tpu_custom_call.1']
    #allocation5 [shape = 's32[2]{0}', space=sflag, size = 0x8, scoped, tag = 'scoped memory for tpu_custom_call.1']
    #allocation6 [shape = 'u8[16384]{0}', space=vmem, size = 0x4000, scoped, tag = 'input window, operand 1, single buffered']
    #allocation7 [shape = 's32[1]{0}', space=sflag, size = 0x4, scoped, tag = 'scoped memory for tpu_custom_call.1']
    #allocation8 [shape = 'u8[8192]{0}', space=vmem, size = 0x2000, scoped, tag = 'output window, operand 0']
    %8 = vsyncpa [#allocation4], 0
    %s9 = scalar_lea.sflag [#allocation4], 1
    %10 = vsyncpa %s9, 0
    %11 = vsyncpa [#allocation7], 0
    %12 = vsyncpa [#allocation5], 0
    %s13 = scalar_lea.sflag [#allocation5], 1
    %14 = vsyncpa %s13, 0
    loop: start=0, step=1, limit=4
    $region2: #{tpu_custom_call.1} parent=1 // loop_pre_header
      _
    $region3: #{tpu_custom_call.1} parent=1 // loop_header
      %s16 = sphi 0, %s20
      %p17 = scmp.ge.s32.totalorder %s16, 4
      %s23 = sphi 0, %s42
      %s24 = sphi 0, %s38
      %s25 = sphi 0, %s34
      %s26 = sphi 0, %s23
      %s27 = sphi 0, %s24
      %s28 = sphi 0, %s25
      %s29 = sphi 0, %s26
      %s30 = sphi 0, %s27
      %s31 = sphi 0, %s28
      %s47 = sphi 0, %s49
      %s50 = sphi 0, %s47
      %s51 = sphi 0, %s50
      %s67 = sphi 0, %s51
      %s75 = sphi 0, %s77
      %s78 = sphi 0, %s75
      %s79 = sphi 0, %s78
      %s95 = sphi 0, %s79
      %s101 = sphi 0, %s103
      %s104 = sphi 0, %s101
      %s105 = sphi 0, %s104
      %s121 = sphi 0, %s105
      %s129 = sphi 0, %s131
      %s132 = sphi 0, %s129
      %s133 = sphi 0, %s132
      %s149 = sphi 0, %s133
    $region4: #{tpu_custom_call.1} parent=1 // loop_header_branch
      %19 = sbr.rel (%p17) target = $region8
    $region5: #{tpu_custom_call.1} parent=1 // loop_body
      %s21 = ssub.s32 %s16, 1
      %s22 = ssub.s32 %s16, 2
      %s32 = sadd.s32 1, %s25
      %p33 = scmp.ge.s32.totalorder %s32, 1
      %s34 = scalar_select %p33, 0, %s32
      %s35 = sadd.s32 1, %s24
      %s36 = scalar_select %p33, %s35, %s24
      %p37 = scmp.ge.s32.totalorder %s36, 1
      %s38 = scalar_select %p37, 0, %s36
      %s39 = sadd.s32 1, %s23
      %s40 = scalar_select %p37, %s39, %s23
      %p41 = scmp.ge.s32.totalorder %s40, 2
      %s42 = scalar_select %p41, 0, %s40
      %s43 = ssub.s32 %s23, %s42
      %s44 = ssub.s32 %s25, %s34
      %s45 = sor.u32 %s43, %s44
      %p46 = scmp.eq.s32.totalorder %s45, 0
      %s48 = sadd.s32 %s47, 1
      %s49 = scalar_select %p46, %s47, %s48
      %p52 = pneg %p46
      %p53 = scmp.eq.s32.totalorder %s16, 1
      %p54 = por %p52, %p53
      %p55 = scmp.ne.s32.totalorder %s47, %s50
      %p56 = scmp.eq.s32.totalorder %s16, 0
      %p57 = por %p55, %p56
      %p58 = scmp.ne.s32.totalorder %s47, %s50
      %p59 = scmp.eq.s32.totalorder %s21, 1
      %p60 = por %p58, %p59
      %p61 = scmp.ne.s32.totalorder %s50, %s51
      %p62 = scmp.eq.s32.totalorder %s21, 0
      %p63 = por %p61, %p62
      %p64 = scmp.ne.s32.totalorder %s50, %s51
      %p65 = scmp.eq.s32.totalorder %s22, 1
      %p66 = por %p64, %p65
      %p68 = scmp.ne.s32.totalorder %s51, %s67
      %p69 = scmp.eq.s32.totalorder %s22, 0
      %p70 = por %p68, %p69
      %s71 = ssub.s32 %s25, %s34
      %s72 = ssub.s32 %s24, %s38
      %s73 = sor.u32 %s71, %s72
      %p74 = scmp.eq.s32.totalorder %s73, 0
      %s76 = sadd.s32 %s75, 1
      %s77 = scalar_select %p74, %s75, %s76
      %p80 = pneg %p74
      %p81 = scmp.eq.s32.totalorder %s16, 1
      %p82 = por %p80, %p81
      %p83 = scmp.ne.s32.totalorder %s75, %s78
      %p84 = scmp.eq.s32.totalorder %s16, 0
      %p85 = por %p83, %p84
      %p86 = scmp.ne.s32.totalorder %s75, %s78
      %p87 = scmp.eq.s32.totalorder %s21, 1
      %p88 = por %p86, %p87
      %p89 = scmp.ne.s32.totalorder %s78, %s79
      %p90 = scmp.eq.s32.totalorder %s21, 0
      %p91 = por %p89, %p90
      %p92 = scmp.ne.s32.totalorder %s78, %s79
      %p93 = scmp.eq.s32.totalorder %s22, 1
      %p94 = por %p92, %p93
      %p96 = scmp.ne.s32.totalorder %s79, %s95
      %p97 = scmp.eq.s32.totalorder %s22, 0
      %p98 = por %p96, %p97
      %s99 = ssub.s32 %s24, %s38
      %p100 = scmp.eq.s32.totalorder %s99, 0
      %s102 = sadd.s32 %s101, 1
      %s103 = scalar_select %p100, %s101, %s102
      %p106 = pneg %p100
      %p107 = scmp.eq.s32.totalorder %s16, 1
      %p108 = por %p106, %p107
      %p109 = scmp.ne.s32.totalorder %s101, %s104
      %p110 = scmp.eq.s32.totalorder %s16, 0
      %p111 = por %p109, %p110
      %p112 = scmp.ne.s32.totalorder %s101, %s104
      %p113 = scmp.eq.s32.totalorder %s21, 1
      %p114 = por %p112, %p113
      %p115 = scmp.ne.s32.totalorder %s104, %s105
      %p116 = scmp.eq.s32.totalorder %s21, 0
      %p117 = por %p115, %p116
      %p118 = scmp.ne.s32.totalorder %s104, %s105
      %p119 = scmp.eq.s32.totalorder %s22, 1
      %p120 = por %p118, %p119
      %p122 = scmp.ne.s32.totalorder %s105, %s121
      %p123 = scmp.eq.s32.totalorder %s22, 0
      %p124 = por %p122, %p123
      %s125 = ssub.s32 %s23, %s42
      %s126 = ssub.s32 %s24, %s38
      %s127 = sor.u32 %s125, %s126
      %p128 = scmp.eq.s32.totalorder %s127, 0
      %s130 = sadd.s32 %s129, 1
      %s131 = scalar_select %p128, %s129, %s130
      %p134 = pneg %p128
      %p135 = scmp.eq.s32.totalorder %s16, 1
      %p136 = por %p134, %p135
      %p137 = scmp.ne.s32.totalorder %s129, %s132
      %p138 = scmp.eq.s32.totalorder %s16, 0
      %p139 = por %p137, %p138
      %p140 = scmp.ne.s32.totalorder %s129, %s132
      %p141 = scmp.eq.s32.totalorder %s21, 1
      %p142 = por %p140, %p141
      %p143 = scmp.ne.s32.totalorder %s132, %s133
      %p144 = scmp.eq.s32.totalorder %s21, 0
      %p145 = por %p143, %p144
      %p146 = scmp.ne.s32.totalorder %s132, %s133
      %p147 = scmp.eq.s32.totalorder %s22, 1
      %p148 = por %p146, %p147
      %p150 = scmp.ne.s32.totalorder %s133, %s149
      %p151 = scmp.eq.s32.totalorder %s22, 0
      %p152 = por %p150, %p151
      %p153 = scmp.le.s32.totalorder 1, %s16
      %p154 = scmp.lt.s32.totalorder %s16, 3
      %p155 = pnand %p153, %p154
      %p156 = pneg %p155
      // Predicated region
      $region9: #{tpu_custom_call.1} parent=5 // pred_check
        _
      $region10: #{tpu_custom_call.1} parent=5 // pred_check_branch
        %158 = sbr.rel (%p155) target = $region12
      $region11: #{tpu_custom_call.1} parent=5 // pred_region
        %s159 = ssub.s32 %s16, 1
        // Predicated region
        $region13: #{tpu_custom_call.1} parent=11 // pred_check
          %p160 = pneg %p91
        $region14: #{tpu_custom_call.1} parent=11 // pred_check_branch
          %162 = sbr.rel (%p160) target = $region16
        $region15: #{tpu_custom_call.1} parent=11 // pred_region
          %s163 = smul.u32 4, %s28
          %165 = vsyncadd [#allocation7], 0
          %s166 = sadd.s32 %s27, %s163
          %s167 = smul.addr %s166, 8
          %s168 = scalar_lea.hbm %s1, %s167
          %s169 = sshll.u32 %s168, 4
          %s170 = int_to_ptr.hbm [resolvable:$true] %s169
          %s171 = sshll.u32 [#allocation6], 4
          %s172 = int_to_ptr.vmem [resolvable:$true] %s171
          %177 = dma.hbm_to_vmem [thread:$0]  %s170, 512, %s172, [#allocation7], 128, 128, 8
        $region16: #{tpu_custom_call.1} parent=11 // pred_fallthru
          _
        // Predicated region
        $region17: #{tpu_custom_call.1} parent=11 // pred_check
          %p178 = pneg %p117
        $region18: #{tpu_custom_call.1} parent=11 // pred_check_branch
          %180 = sbr.rel (%p178) target = $region20
        $region19: #{tpu_custom_call.1} parent=11 // pred_region
          %p181 = scmp.lt.s32.totalorder %s27, 0
          %s182 = scalar_select %p181, %s27, 0
          %s183 = scalar_lea.vmem %s2, %s182
        $region20: #{tpu_custom_call.1} parent=11 // pred_fallthru
          _
      $region12: #{tpu_custom_call.1} parent=5 // pred_fallthru
        _
      %p184 = scmp.lt.s32.totalorder %s16, 2
      // Predicated region
      $region21: #{tpu_custom_call.1} parent=5 // pred_check
        %p185 = pneg %p184
      $region22: #{tpu_custom_call.1} parent=5 // pred_check_branch
        %187 = sbr.rel (%p185) target = $region24
      $region23: #{tpu_custom_call.1} parent=5 // pred_region
        // Predicated region
        $region25: #{tpu_custom_call.1} parent=23 // pred_check
          %p188 = pneg %p57
        $region26: #{tpu_custom_call.1} parent=23 // pred_check_branch
          %190 = sbr.rel (%p188) target = $region28
        $region27: #{tpu_custom_call.1} parent=23 // pred_region
          %s191 = sand.u32 %s47, 1
          %s192 = scalar_lea.sflag [#allocation4], %s191
          %s193 = sand.u32 %s47, 1
          %s194 = smul.addr %s193, 8
          %s195 = scalar_lea.vmem [#allocation3], %s194
          %197 = vsyncadd %s192, 0
          %s198 = sadd.s32 %s25, %s23
          %s199 = smul.addr %s198, 8
          %s200 = scalar_lea.hbm %s0, %s199
          %s202 = sshll.u32 %s200, 4
          %s203 = int_to_ptr.hbm [resolvable:$true] %s202
          %s204 = sshll.u32 %s195, 4
          %s205 = int_to_ptr.vmem [resolvable:$true] %s204
          %207 = dma.hbm_to_vmem [thread:$0]  %s203, 128, %s205, %s192
        $region28: #{tpu_custom_call.1} parent=23 // pred_fallthru
          _
      $region24: #{tpu_custom_call.1} parent=5 // pred_fallthru
        _
      %p208 = scmp.le.s32.totalorder 1, %s16
      %p209 = scmp.lt.s32.totalorder %s16, 3
      %p210 = pnand %p208, %p209
      %p211 = pneg %p210
      // Predicated region
      $region29: #{tpu_custom_call.1} parent=5 // pred_check
        _
      $region30: #{tpu_custom_call.1} parent=5 // pred_check_branch
        %213 = sbr.rel (%p210) target = $region32
      $region31: #{tpu_custom_call.1} parent=5 // pred_region
        %s214 = ssub.s32 %s16, 1
        %s215 = sand.u32 %s50, 1
        %s216 = scalar_lea.sflag [#allocation4], %s215
        %s217 = sand.u32 %s50, 1
        %s218 = smul.addr %s217, 8
        %s219 = scalar_lea.vmem [#allocation3], %s218
        // Predicated region
        $region33: #{tpu_custom_call.1} parent=31 // pred_check
          %p220 = pneg %p63
        $region34: #{tpu_custom_call.1} parent=31 // pred_check_branch
          %222 = sbr.rel (%p220) target = $region36
        $region35: #{tpu_custom_call.1} parent=31 // pred_region
          %224 = dma.done %s216, 128
        $region36: #{tpu_custom_call.1} parent=31 // pred_fallthru
          _
        // Predicated region
        $region37: #{tpu_custom_call.1} parent=31 // pred_check
          %p225 = pneg %p91
        $region38: #{tpu_custom_call.1} parent=31 // pred_check_branch
          %227 = sbr.rel (%p225) target = $region40
        $region39: #{tpu_custom_call.1} parent=31 // pred_region
          %229 = dma.done [#allocation7], 512
        $region40: #{tpu_custom_call.1} parent=31 // pred_fallthru
          _
        %s230 = sand.u32 %s50, 1
        %s231 = scalar_lea.sflag [#allocation4], %s230
        %s232 = sand.u32 %s50, 1
        %s233 = smul.addr %s232, 8
        %s234 = scalar_lea.vmem [#allocation3], %s233
        %p235 = pneg %p63
        %p236 = pneg %p60
        %p237 = pneg %p91
        %p238 = pneg %p88
        %p239 = scmp.lt.s32.totalorder %s27, 0
        %s240 = scalar_select %p239, %s27, 0
        %s241 = scalar_lea.vmem %s2, %s240
        %p242 = pneg %p117
        %p243 = pneg %p114
        %p244 = pneg %p145
        %p245 = pneg %p142
        %s246 = sand.u32 %s132, 1
        %s247 = scalar_lea.sflag [#allocation5], %s246
        %s248 = sand.u32 %s132, 1
        %s249 = smul.addr %s248, 8
        %s250 = scalar_lea.vmem [#allocation8], %s249
        %s251 = smul.u32 4, %s28
        %p252 = scmp.lt.s32.totalorder %s27, 0
        %s253 = scalar_select %p252, %s27, 0
        %s254 = scalar_lea.vmem %s2, %s253
        %p255 = scmp.eq.s32.totalorder %s28, 0
        // Predicated region
        $region41: #{tpu_custom_call.1} parent=31 // pred_check
          %p256 = pneg %p255
        $region42: #{tpu_custom_call.1} parent=31 // pred_check_branch
          %258 = sbr.rel (%p256) target = $region44
        $region43: #{tpu_custom_call.1} parent=31 // pred_region
          %259 = vst [vmem:[#allocation2] sm:$0xff] 0.0
        $region44: #{tpu_custom_call.1} parent=31 // pred_fallthru
          _
        %v260 = vld [vmem:[#allocation2] sm:$0xff]
        %v261 = vld [vmem:[%s219] sm:$0xff]
        %v262 = vld [vmem:[#allocation6] sm:$0xff]
        %v263 = vld [vmem:[#allocation6 + $0x8] sm:$0xff]
        %v264 = vld [vmem:[#allocation6 + $0x10] sm:$0xff]
        %v265 = vld [vmem:[#allocation6 + $0x18] sm:$0xff]
        %vm266 = vcmask 261120
        %v268 = vsel %vm266, %v261, 0
        %270 = vmatpush.msra.mxu0 0.0
        %271 = vmatpush.msra.mxu0 0.0
        %272 = vmatpush.msra.mxu0 0.0
        %273 = vmatpush.msra.mxu0 0.0
        %274 = vmatpush.msra.mxu0 0.0
        %275 = vmatpush.msra.mxu0 0.0
        %276 = vmatpush.msra.mxu0 0.0
        %277 = vmatpush.msra.mxu0 0.0
        %278 = vmatpush.msra.mxu0 0.0
        %279 = vmatpush.msra.mxu0 0.0
        %280 = vmatpush.msra.mxu0 0.0
        %281 = vmatpush.msra.mxu0 0.0
        %282 = vmatpush.msra.mxu0 %v265
        %283 = vmatpush.msra.mxu0 %v264
        %284 = vmatpush.msra.mxu0 %v263
        %285 = vmatpush.msra.mxu0 %v262
        %286 = vmatmul.f32.gmra.mxu0 %v268
        %v287 = vpop.f32.mrf.mxu0
        %v288 = vadd.f32 0.0, %v287
        %289 = vdwg.mxu0
        %v290 = vadd.f32 %v260, %v288
        %291 = vst [vmem:[#allocation2] sm:$0xff] %v290
        // Predicated region
        $region45: #{tpu_custom_call.1} parent=31 // pred_check
          %p292 = pneg %p255
        $region46: #{tpu_custom_call.1} parent=31 // pred_check_branch
          %294 = sbr.rel (%p292) target = $region48
        $region47: #{tpu_custom_call.1} parent=31 // pred_region
          %v295 = vld [vmem:[#allocation2] sm:$0xff]
          %v296 = vld [vmem:[%s254] sm:$0x1]
          %v298 = vperm.slane %v296, 0
          %v300 = vadd.f32 %v295, %v298
          %301 = vst [vmem:[%s250] sm:$0xff] %v300
        $region48: #{tpu_custom_call.1} parent=31 // pred_fallthru
          _
        %s302 = sand.u32 %s132, 1
        %s303 = scalar_lea.sflag [#allocation5], %s302
        %s304 = sand.u32 %s132, 1
        %s305 = smul.addr %s304, 8
        %s306 = scalar_lea.vmem [#allocation8], %s305
        // Predicated region
        $region49: #{tpu_custom_call.1} parent=31 // pred_check
          %p307 = pneg %p142
        $region50: #{tpu_custom_call.1} parent=31 // pred_check_branch
          %309 = sbr.rel (%p307) target = $region52
        $region51: #{tpu_custom_call.1} parent=31 // pred_region
          %311 = vsyncadd %s303, 0
          %s312 = sadd.s32 %s27, %s26
          %s313 = smul.addr %s312, 8
          %s314 = scalar_lea.hbm %s3, %s313
          %s316 = sshll.u32 %s306, 4
          %s317 = int_to_ptr.vmem [resolvable:$true] %s316
          %s318 = sshll.u32 %s314, 4
          %s319 = int_to_ptr.hbm [resolvable:$true] %s318
          %321 = dma.vmem_to_hbm [thread:$0]  %s317, 128, %s319, %s303
        $region52: #{tpu_custom_call.1} parent=31 // pred_fallthru
          _
      $region32: #{tpu_custom_call.1} parent=5 // pred_fallthru
        _
      %p322 = scmp.le.s32.totalorder 2, %s16
      // Predicated region
      $region53: #{tpu_custom_call.1} parent=5 // pred_check
        %p323 = pneg %p322
      $region54: #{tpu_custom_call.1} parent=5 // pred_check_branch
        %325 = sbr.rel (%p323) target = $region56
      $region55: #{tpu_custom_call.1} parent=5 // pred_region
        %s326 = ssub.s32 %s16, 2
        // Predicated region
        $region57: #{tpu_custom_call.1} parent=55 // pred_check
          %p327 = pneg %p148
        $region58: #{tpu_custom_call.1} parent=55 // pred_check_branch
          %329 = sbr.rel (%p327) target = $region60
        $region59: #{tpu_custom_call.1} parent=55 // pred_region
          %s330 = sand.u32 %s133, 1
          %s331 = scalar_lea.sflag [#allocation5], %s330
          %s332 = sand.u32 %s133, 1
          %s333 = smul.addr %s332, 8
          %s334 = scalar_lea.vmem [#allocation8], %s333
          %336 = dma.done %s331, 128
        $region60: #{tpu_custom_call.1} parent=55 // pred_fallthru
          _
      $region56: #{tpu_custom_call.1} parent=5 // pred_fallthru
        _
    $region6: #{tpu_custom_call.1} parent=1 // loop_footer
      %s20 = sadd.s32 1, %s16
    $region7: #{tpu_custom_call.1} parent=1 // loop_footer_branch
      %15 = sbr.rel target = $region3
    $region8: #{tpu_custom_call.1} parent=1 // loop_exit
      _
    %337 = vsyncpa [#allocation4], 1
    %s338 = scalar_lea.sflag [#allocation4], 1
    %339 = vsyncpa %s338, 1
    %340 = vsyncpa [#allocation7], 1
    %341 = vsyncpa [#allocation5], 1
    %s342 = scalar_lea.sflag [#allocation5], 1
    %343 = vsyncpa %s342, 1

</llo_original>
